<compile_context>
chip_gen: v5e
topology: v5e:2x2
jax: 0.10.0
libtpu: 0.0.40
codegen_flags: <defaults>
</compile_context>

<pallas_src>
import functools
import math

import jax
import jax.numpy as jnp
import numpy as np
from jax.experimental import pallas as pl
from jax.experimental.pallas import tpu as pltpu

_ROW_TILE = 2048                      # rows of 128 lanes -> 1 MiB / f32 input / buffer
_SMALL_SAMPLE_VMEM_BYTES = 2 << 20    # per-input-per-buffer budget when batching samples


def _psnr_loss_kernel(pred_ref, targ_ref, loss_ref,
                      sumsq_acc, max_acc, min_acc, *,
                      n, r_tile, needs_mask, eps, offset, inv_n, log_scale):
    # pred_ref / targ_ref: (B_TILE, R_TILE, 128) VMEM tiles.
    # loss_ref:            (B_TILE, 1, 128) VMEM output (loss broadcast over lanes).
    # *_acc:               (B_TILE, 1, 128) VMEM scratch accumulators.
    k = pl.program_id(1)
    nk = pl.num_programs(1)

    @pl.when(k == 0)
    def _init():
        sumsq_acc[...] = jnp.zeros(sumsq_acc.shape, jnp.float32)
        max_acc[...] = jnp.full(max_acc.shape, -jnp.inf, jnp.float32)
        min_acc[...] = jnp.full(min_acc.shape, jnp.inf, jnp.float32)

    pred = pred_ref[...].astype(jnp.float32)
    targ = targ_ref[...].astype(jnp.float32)
    diff = pred - targ
    sq = diff * diff

    def _accumulate(sq_v, t_hi, t_lo):
        # Fold only the row (sublane) axis here; keep 128 lanes in the
        # accumulators so the cross-lane XLU reduce happens once per sample.
        sumsq_acc[...] += jnp.sum(sq_v, axis=1, keepdims=True)
        max_acc[...] = jnp.maximum(max_acc[...], jnp.max(t_hi, axis=1, keepdims=True))
        min_acc[...] = jnp.minimum(min_acc[...], jnp.min(t_lo, axis=1, keepdims=True))

    if needs_mask:
        # Only the *last* reduction tile can contain padded / out-of-bounds
        # elements, so the mask work (iota + cmp + sel) runs once, not per step.
        @pl.when(k < nk - 1)
        def _bulk():
            _accumulate(sq, targ, targ)

        @pl.when(k == nk - 1)
        def _tail():
            row = jax.lax.broadcasted_iota(jnp.int32, pred.shape, 1)
            lane = jax.lax.broadcasted_iota(jnp.int32, pred.shape, 2)
            flat_idx = (k * r_tile + row) * 128 + lane
            valid = flat_idx < n
            _accumulate(jnp.where(valid, sq, 0.0),
                        jnp.where(valid, targ, -jnp.inf),
                        jnp.where(valid, targ, jnp.inf))
    else:
        _accumulate(sq, targ, targ)

    @pl.when(k == nk - 1)
    def _finalize():
        mse = jnp.sum(sumsq_acc[...], axis=2, keepdims=True) * inv_n + eps
        data_range = (jnp.max(max_acc[...], axis=2, keepdims=True)
                      - jnp.min(min_acc[...], axis=2, keepdims=True) + eps)
        psnr = log_scale * jnp.log(data_range * data_range / mse)
        loss = offset - psnr                                # (B_TILE, 1, 1)
        loss_ref[...] = jnp.broadcast_to(loss, loss_ref.shape)


def psnr_loss(pred, target, *, reduction="mean", eps=1e-8, offset=50.0):
    assert pred.shape == target.shape, "pred/target must have the same shape"
    b = pred.shape[0]
    n = int(np.prod(pred.shape[1:]))

    # Lane-dense per-sample layout: rows of 128 lanes.  Only pad up to the
    # next multiple of 128 (needed for the reshape); everything else (partial
    # reduction tiles, partial batch tiles) is handled by Pallas OOB blocks
    # plus in-kernel masking, avoiding extra HBM passes.
    r = (n + 127) // 128
    n128 = r * 128

    if r <= _ROW_TILE:
        r_tile = r                       # full-dim block: no divisibility needed
        b_tile = max(1, min(b, _SMALL_SAMPLE_VMEM_BYTES // (r_tile * 128 * 4)))
    else:
        r_tile = _ROW_TILE
        b_tile = 1
    kt = (r + r_tile - 1) // r_tile
    needs_mask = (n != kt * r_tile * 128)

    pred_flat = pred.reshape(b, n)
    targ_flat = target.reshape(b, n)
    if n128 != n:
        pad = ((0, 0), (0, n128 - n))
        pred_flat = jnp.pad(pred_flat, pad)
        targ_flat = jnp.pad(targ_flat, pad)
    pred3 = pred_flat.reshape(b, r, 128)
    targ3 = targ_flat.reshape(b, r, 128)

    kernel = functools.partial(
        _psnr_loss_kernel,
        n=n, r_tile=r_tile, needs_mask=needs_mask,
        eps=float(eps), offset=float(offset),
        inv_n=1.0 / float(n),
        log_scale=10.0 / math.log(10.0),
    )

    out = pl.pallas_call(
        kernel,
        out_shape=jax.ShapeDtypeStruct((b, 1, 128), jnp.float32),
        grid_spec=pltpu.PrefetchScalarGridSpec(
            num_scalar_prefetch=0,
            grid=(pl.cdiv(b, b_tile), kt),
            in_specs=[
                pl.BlockSpec((b_tile, r_tile, 128), lambda i, k: (i, k, 0)),
                pl.BlockSpec((b_tile, r_tile, 128), lambda i, k: (i, k, 0)),
            ],
            out_specs=pl.BlockSpec((b_tile, 1, 128), lambda i, k: (i, 0, 0)),
            scratch_shapes=[
                pltpu.VMEM((b_tile, 1, 128), jnp.float32),   # sum of diff^2
                pltpu.VMEM((b_tile, 1, 128), jnp.float32),   # running max(target)
                pltpu.VMEM((b_tile, 1, 128), jnp.float32),   # running min(target)
            ],
        ),
        compiler_params=pltpu.CompilerParams(
            dimension_semantics=("parallel", "arbitrary"),
        ),
    )(pred3, targ3)

    per_sample = out[:, 0, 0]

    if reduction == "mean":
        return jnp.mean(per_sample)
    elif reduction == "sum":
        return jnp.sum(per_sample)
    else:  # 'none'
        return per_sample


def _psnr_loss_ref(pred, target, *, reduction="mean", eps=1e-8, offset=50.0):
    """Pure-JAX reference mirroring the PyTorch module."""
    b = pred.shape[0]
    dims = tuple(range(1, pred.ndim))
    mse = jnp.mean((pred - target) ** 2, axis=dims) + eps
    flat = target.reshape(b, -1)
    data_range = jnp.max(flat, axis=1) - jnp.min(flat, axis=1) + eps
    psnr = 10.0 * (1.0 / jnp.log(10.0)) * jnp.log(data_range**2 / mse)
    loss = offset - psnr
    if reduction == "mean":
        return jnp.mean(loss)
    elif reduction == "sum":
        return jnp.sum(loss)
    return loss


if __name__ == "__main__":
    key = jax.random.PRNGKey(0)
    k_pred, k_targ = jax.random.split(key)

    # NCHW, Z-score-normalized-ish inputs.
    B, C, H, W = 2, 4, 16, 16
    pred = jax.random.normal(k_pred, (B, C, H, W), dtype=jnp.float32)
    target = jax.random.normal(k_targ, (B, C, H, W), dtype=jnp.float32)

    out = jax.block_until_ready(psnr_loss(pred, target, reduction="mean"))
    ref = jax.block_until_ready(_psnr_loss_ref(pred, target, reduction="mean"))
    np.testing.assert_allclose(np.asarray(out), np.asarray(ref), rtol=1e-5, atol=1e-5)

    out_n = jax.block_until_ready(psnr_loss(pred, target, reduction="none"))
    ref_n = jax.block_until_ready(_psnr_loss_ref(pred, target, reduction="none"))
    np.testing.assert_allclose(np.asarray(out_n), np.asarray(ref_n), rtol=1e-5, atol=1e-5)

    # Ragged shape (N not a multiple of 128) exercises the masked-tail path.
    pred2 = jax.random.normal(k_pred, (3, 3, 5, 7), dtype=jnp.float32)
    targ2 = jax.random.normal(k_targ, (3, 3, 5, 7), dtype=jnp.float32)
    out2 = jax.block_until_ready(psnr_loss(pred2, targ2, reduction="sum"))
    ref2 = jax.block_until_ready(_psnr_loss_ref(pred2, targ2, reduction="sum"))
    np.testing.assert_allclose(np.asarray(out2), np.asarray(ref2), rtol=1e-5, atol=1e-5)

    # Larger sample that spans multiple reduction tiles with a partial last
    # tile (and a batch size that does not divide the batch tile).
    pred3 = jax.random.normal(k_pred, (3, 3, 160, 160), dtype=jnp.float32)
    targ3 = jax.random.normal(k_targ, (3, 3, 160, 160), dtype=jnp.float32)
    out3 = jax.block_until_ready(psnr_loss(pred3, targ3, reduction="none"))
    ref3 = jax.block_until_ready(_psnr_loss_ref(pred3, targ3, reduction="none"))
    np.testing.assert_allclose(np.asarray(out3), np.asarray(ref3), rtol=1e-5, atol=1e-5)

    print("KERNEL_OK")
</pallas_src>

<mosaic_0001>
module attributes {stable_mosaic.version = 11 : i64} {
  func.func @_psnr_loss_kernel(%arg0: i32, %arg1: i32, %arg2: memref<2x8x128xf32, #tpu.memory_space<vmem>>, %arg3: memref<2x8x128xf32, #tpu.memory_space<vmem>>, %arg4: memref<2x1x128xf32, #tpu.memory_space<vmem>>, %arg5: memref<2x1x128xf32, #tpu.memory_space<vmem>>, %arg6: memref<2x1x128xf32, #tpu.memory_space<vmem>>, %arg7: memref<2x1x128xf32, #tpu.memory_space<vmem>>) attributes {dimension_semantics = [#tpu.dimension_semantics<parallel>, #tpu.dimension_semantics<arbitrary>], iteration_bounds = array<i64: 1, 1>, scalar_prefetch = 0 : i64, scratch_operands = 3 : i64, tpu.core_type = #tpu.core_type<tc>, window_params = [{transform_indices = @transform_0, window_bounds = array<i64: 2, 8, 128>}, {transform_indices = @transform_1, window_bounds = array<i64: 2, 8, 128>}, {transform_indices = @transform_2, window_bounds = array<i64: 2, 1, 128>}]} {
    %c0_i32 = arith.constant 0 : i32
    %0 = arith.cmpi eq, %arg1, %c0_i32 : i32
    %1 = arith.extui %0 : i1 to i32
    %c0_i32_0 = arith.constant 0 : i32
    %2 = arith.cmpi ne, %1, %c0_i32_0 : i32
    scf.if %2 {
      %cst_28 = arith.constant 0.000000e+00 : f32
      %25 = vector.broadcast %cst_28 : f32 to vector<2x1x128xf32>
      %c0_29 = arith.constant 0 : index
      %c0_30 = arith.constant 0 : index
      %c0_31 = arith.constant 0 : index
      %26 = vector.load %arg5[%c0_29, %c0_30, %c0_31] : memref<2x1x128xf32, #tpu.memory_space<vmem>>, vector<2x1x128xf32>
      tpu.vector_store %arg5[%c0_29, %c0_30, %c0_31], %25 {strides = array<i32>} : memref<2x1x128xf32, #tpu.memory_space<vmem>>, vector<2x1x128xf32>,
      %cst_32 = arith.constant 0xFF800000 : f32
      %27 = vector.broadcast %cst_32 : f32 to vector<2x1x128xf32>
      %c0_33 = arith.constant 0 : index
      %c0_34 = arith.constant 0 : index
      %c0_35 = arith.constant 0 : index
      %28 = vector.load %arg6[%c0_33, %c0_34, %c0_35] : memref<2x1x128xf32, #tpu.memory_space<vmem>>, vector<2x1x128xf32>
      tpu.vector_store %arg6[%c0_33, %c0_34, %c0_35], %27 {strides = array<i32>} : memref<2x1x128xf32, #tpu.memory_space<vmem>>, vector<2x1x128xf32>,
      %cst_36 = arith.constant 0x7F800000 : f32
      %29 = vector.broadcast %cst_36 : f32 to vector<2x1x128xf32>
      %c0_37 = arith.constant 0 : index
      %c0_38 = arith.constant 0 : index
      %c0_39 = arith.constant 0 : index
      %30 = vector.load %arg7[%c0_37, %c0_38, %c0_39] : memref<2x1x128xf32, #tpu.memory_space<vmem>>, vector<2x1x128xf32>
      tpu.vector_store %arg7[%c0_37, %c0_38, %c0_39], %29 {strides = array<i32>} : memref<2x1x128xf32, #tpu.memory_space<vmem>>, vector<2x1x128xf32>,
    } else {
    }
    %c0 = arith.constant 0 : index
    %c0_1 = arith.constant 0 : index
    %c0_2 = arith.constant 0 : index
    %3 = vector.load %arg2[%c0, %c0_1, %c0_2] : memref<2x8x128xf32, #tpu.memory_space<vmem>>, vector<2x8x128xf32>
    %c0_3 = arith.constant 0 : index
    %c0_4 = arith.constant 0 : index
    %c0_5 = arith.constant 0 : index
    %4 = vector.load %arg3[%c0_3, %c0_4, %c0_5] : memref<2x8x128xf32, #tpu.memory_space<vmem>>, vector<2x8x128xf32>
    %5 = arith.subf %3, %4 : vector<2x8x128xf32>
    %6 = arith.mulf %5, %5 : vector<2x8x128xf32>
    %c0_6 = arith.constant 0 : index
    %c0_7 = arith.constant 0 : index
    %c0_8 = arith.constant 0 : index
    %7 = vector.load %arg5[%c0_6, %c0_7, %c0_8] : memref<2x1x128xf32, #tpu.memory_space<vmem>>, vector<2x1x128xf32>
    %cst = arith.constant dense<0.000000e+00> : vector<2x128xf32>
    %8 = vector.multi_reduction <add>, %6, %cst [1] : vector<2x8x128xf32> to vector<2x128xf32>
    %9 = vector.shape_cast %8 : vector<2x128xf32> to vector<2x1x128xf32>
    %10 = arith.addf %7, %9 : vector<2x1x128xf32>
    %c0_9 = arith.constant 0 : index
    %c0_10 = arith.constant 0 : index
    %c0_11 = arith.constant 0 : index
    %11 = vector.load %arg5[%c0_9, %c0_10, %c0_11] : memref<2x1x128xf32, #tpu.memory_space<vmem>>, vector<2x1x128xf32>
    tpu.vector_store %arg5[%c0_9, %c0_10, %c0_11], %10 {strides = array<i32>} : memref<2x1x128xf32, #tpu.memory_space<vmem>>, vector<2x1x128xf32>,
    %c0_12 = arith.constant 0 : index
    %c0_13 = arith.constant 0 : index
    %c0_14 = arith.constant 0 : index
    %12 = vector.load %arg6[%c0_12, %c0_13, %c0_14] : memref<2x1x128xf32, #tpu.memory_space<vmem>>, vector<2x1x128xf32>
    %cst_15 = arith.constant dense<0xFF800000> : vector<2x128xf32>
    %13 = vector.multi_reduction <maximumf>, %4, %cst_15 [1] : vector<2x8x128xf32> to vector<2x128xf32>
    %14 = vector.shape_cast %13 : vector<2x128xf32> to vector<2x1x128xf32>
    %15 = arith.maximumf %12, %14 : vector<2x1x128xf32>
    %c0_16 = arith.constant 0 : index
    %c0_17 = arith.constant 0 : index
    %c0_18 = arith.constant 0 : index
    %16 = vector.load %arg6[%c0_16, %c0_17, %c0_18] : memref<2x1x128xf32, #tpu.memory_space<vmem>>, vector<2x1x128xf32>
    tpu.vector_store %arg6[%c0_16, %c0_17, %c0_18], %15 {strides = array<i32>} : memref<2x1x128xf32, #tpu.memory_space<vmem>>, vector<2x1x128xf32>,
    %c0_19 = arith.constant 0 : index
    %c0_20 = arith.constant 0 : index
    %c0_21 = arith.constant 0 : index
    %17 = vector.load %arg7[%c0_19, %c0_20, %c0_21] : memref<2x1x128xf32, #tpu.memory_space<vmem>>, vector<2x1x128xf32>
    %cst_22 = arith.constant dense<0x7F800000> : vector<2x128xf32>
    %18 = vector.multi_reduction <minimumf>, %4, %cst_22 [1] : vector<2x8x128xf32> to vector<2x128xf32>
    %19 = vector.shape_cast %18 : vector<2x128xf32> to vector<2x1x128xf32>
    %20 = arith.minimumf %17, %19 : vector<2x1x128xf32>
    %c0_23 = arith.constant 0 : index
    %c0_24 = arith.constant 0 : index
    %c0_25 = arith.constant 0 : index
    %21 = vector.load %arg7[%c0_23, %c0_24, %c0_25] : memref<2x1x128xf32, #tpu.memory_space<vmem>>, vector<2x1x128xf32>
    tpu.vector_store %arg7[%c0_23, %c0_24, %c0_25], %20 {strides = array<i32>} : memref<2x1x128xf32, #tpu.memory_space<vmem>>, vector<2x1x128xf32>,
    %c0_i32_26 = arith.constant 0 : i32
    %22 = arith.cmpi eq, %arg1, %c0_i32_26 : i32
    %23 = arith.extui %22 : i1 to i32
    %c0_i32_27 = arith.constant 0 : i32
    %24 = arith.cmpi ne, %23, %c0_i32_27 : i32
    scf.if %24 {
      %c0_28 = arith.constant 0 : index
      %c0_29 = arith.constant 0 : index
      %c0_30 = arith.constant 0 : index
      %25 = vector.load %arg5[%c0_28, %c0_29, %c0_30] : memref<2x1x128xf32, #tpu.memory_space<vmem>>, vector<2x1x128xf32>
      %cst_31 = arith.constant dense<0.000000e+00> : vector<2x1xf32>
      %26 = vector.multi_reduction <add>, %25, %cst_31 [2] : vector<2x1x128xf32> to vector<2x1xf32>
      %27 = vector.shape_cast %26 : vector<2x1xf32> to vector<2x1x1xf32>
      %cst_32 = arith.constant 9.765625E-4 : f32
      %28 = vector.broadcast %cst_32 : f32 to vector<2x1x1xf32>
      %29 = arith.mulf %27, %28 : vector<2x1x1xf32>
      %cst_33 = arith.constant 9.99999993E-9 : f32
      %30 = vector.broadcast %cst_33 : f32 to vector<2x1x1xf32>
      %31 = arith.addf %29, %30 : vector<2x1x1xf32>
      %c0_34 = arith.constant 0 : index
      %c0_35 = arith.constant 0 : index
      %c0_36 = arith.constant 0 : index
      %32 = vector.load %arg6[%c0_34, %c0_35, %c0_36] : memref<2x1x128xf32, #tpu.memory_space<vmem>>, vector<2x1x128xf32>
      %cst_37 = arith.constant dense<0xFF800000> : vector<2x1xf32>
      %33 = vector.multi_reduction <maximumf>, %32, %cst_37 [2] : vector<2x1x128xf32> to vector<2x1xf32>
      %34 = vector.shape_cast %33 : vector<2x1xf32> to vector<2x1x1xf32>
      %c0_38 = arith.constant 0 : index
      %c0_39 = arith.constant 0 : index
      %c0_40 = arith.constant 0 : index
      %35 = vector.load %arg7[%c0_38, %c0_39, %c0_40] : memref<2x1x128xf32, #tpu.memory_space<vmem>>, vector<2x1x128xf32>
      %cst_41 = arith.constant dense<0x7F800000> : vector<2x1xf32>
      %36 = vector.multi_reduction <minimumf>, %35, %cst_41 [2] : vector<2x1x128xf32> to vector<2x1xf32>
      %37 = vector.shape_cast %36 : vector<2x1xf32> to vector<2x1x1xf32>
      %38 = arith.subf %34, %37 : vector<2x1x1xf32>
      %cst_42 = arith.constant 9.99999993E-9 : f32
      %39 = vector.broadcast %cst_42 : f32 to vector<2x1x1xf32>
      %40 = arith.addf %38, %39 : vector<2x1x1xf32>
      %41 = arith.mulf %40, %40 : vector<2x1x1xf32>
      %42 = arith.divf %41, %31 : vector<2x1x1xf32>
      %43 = math.log %42 : vector<2x1x1xf32>
      %cst_43 = arith.constant 4.34294462 : f32
      %44 = vector.broadcast %cst_43 : f32 to vector<2x1x1xf32>
      %45 = arith.mulf %44, %43 : vector<2x1x1xf32>
      %cst_44 = arith.constant 5.000000e+01 : f32
      %46 = vector.broadcast %cst_44 : f32 to vector<2x1x1xf32>
      %47 = arith.subf %46, %45 : vector<2x1x1xf32>
      %48 = vector.shape_cast %47 : vector<2x1x1xf32> to vector<2x1x1xf32>
      %49 = vector.broadcast %48 : vector<2x1x1xf32> to vector<2x1x128xf32>
      %c0_45 = arith.constant 0 : index
      %c0_46 = arith.constant 0 : index
      %c0_47 = arith.constant 0 : index
      %50 = vector.load %arg4[%c0_45, %c0_46, %c0_47] : memref<2x1x128xf32, #tpu.memory_space<vmem>>, vector<2x1x128xf32>
      tpu.vector_store %arg4[%c0_45, %c0_46, %c0_47], %49 {strides = array<i32>} : memref<2x1x128xf32, #tpu.memory_space<vmem>>, vector<2x1x128xf32>,
    } else {
    }
    return
  }
  func.func @transform_0(%arg0: i32, %arg1: i32) -> (i32, i32, i32) {
    %c0_i32 = arith.constant 0 : i32
    %c0_i32_0 = arith.constant 0 : i32
    return %arg0, %arg1, %c0_i32 : i32, i32, i32
  }
  func.func @transform_1(%arg0: i32, %arg1: i32) -> (i32, i32, i32) {
    %c0_i32 = arith.constant 0 : i32
    %c0_i32_0 = arith.constant 0 : i32
    return %arg0, %arg1, %c0_i32 : i32, i32, i32
  }
  func.func @transform_2(%arg0: i32, %arg1: i32) -> (i32, i32, i32) {
    %c0_i32 = arith.constant 0 : i32
    %c0_i32_0 = arith.constant 0 : i32
    %c0_i32_1 = arith.constant 0 : i32
    return %arg0, %c0_i32, %c0_i32_0 : i32, i32, i32
  }
}

</mosaic_0001>

<llo_original>
// kernel: tpu_custom_call.1
$region0: #{tpu_custom_call.1}
  #allocation0 [shape = 'u32[]', space=smem, size = 0x4, offset = 0x4, fixed_abs, tag = 'smem constant byte address 0x4 - core index']
  #allocation1 [shape = 'u32[72,128]{1,0:T(1,128)}', space=vmem, size = 0x9000, scoped, tag = 'internal scratch']
  #allocation2 [shape = 'f32[2,1,128]{2,1,0:T(1,128)}', space=vmem, size = 0x400, scoped, tag = 'scratch operand']
  #allocation3 [shape = 'f32[2,1,128]{2,1,0:T(1,128)}', space=vmem, size = 0x400, scoped, tag = 'scratch operand']
  #allocation4 [shape = 'f32[2,1,128]{2,1,0:T(1,128)}', space=vmem, size = 0x400, scoped, tag = 'scratch operand']
  %s0 = inlined_call_operand.hbm [shape: f32[2,8,128], index: 0, kind: input, shape index: {}]
  %s1 = inlined_call_operand.hbm [shape: f32[2,8,128], index: 1, kind: input, shape index: {}]
  %s2 = inlined_call_operand.hbm [shape: f32[2,1,128], index: 2, kind: output, shape index: {}]
  %s3 = sld [smem:[#allocation0]]
  $region34: #{tpu_custom_call.1} parent=0
    _
  %s5 = ssub.s32 1, %s3
  %s6 = scalar_select 0, %s5, %s3
  $region1: #{tpu_custom_call.1} parent=0
    #allocation5 [shape = 'u8[8192]{0}', space=vmem, size = 0x2000, scoped, tag = 'input window, operand 0, single buffered']
    #allocation6 [shape = 's32[1]{0}', space=sflag, size = 0x4, scoped, tag = 'scoped memory for tpu_custom_call.1']
    #allocation7 [shape = 's32[1]{0}', space=sflag, size = 0x4, scoped, tag = 'scoped memory for tpu_custom_call.1']
    #allocation8 [shape = 'u8[8192]{0}', space=vmem, size = 0x2000, scoped, tag = 'input window, operand 1, single buffered']
    #allocation9 [shape = 's32[1]{0}', space=sflag, size = 0x4, scoped, tag = 'scoped memory for tpu_custom_call.1']
    #allocation10 [shape = 'u8[1024]{0}', space=vmem, size = 0x400, scoped, tag = 'output window, operand 0, single buffered']
    %7 = vsyncpa [#allocation6], 0
    %8 = vsyncpa [#allocation9], 0
    %9 = vsyncpa [#allocation7], 0
    // Predicated region
    $region2: #{tpu_custom_call.1} parent=1 // pred_check
      _
    $region3: #{tpu_custom_call.1} parent=1 // pred_check_branch
      %11 = sbr.rel (0) target = $region5
    $region4: #{tpu_custom_call.1} parent=1 // pred_region
      %13 = vsyncadd [#allocation6], 0
      %s14 = sshll.u32 %s0, 4
      %s15 = int_to_ptr.hbm [resolvable:$true] %s14
      %s16 = sshll.u32 [#allocation5], 4
      %s17 = int_to_ptr.vmem [resolvable:$true] %s16
      %22 = dma.hbm_to_vmem [thread:$0]  %s15, 256, %s17, [#allocation6], 128, 128, 8
    $region5: #{tpu_custom_call.1} parent=1 // pred_fallthru
      _
    // Predicated region
    $region6: #{tpu_custom_call.1} parent=1 // pred_check
      _
    $region7: #{tpu_custom_call.1} parent=1 // pred_check_branch
      %24 = sbr.rel (0) target = $region9
    $region8: #{tpu_custom_call.1} parent=1 // pred_region
      %26 = vsyncadd [#allocation9], 0
      %s27 = sshll.u32 %s1, 4
      %s28 = int_to_ptr.hbm [resolvable:$true] %s27
      %s29 = sshll.u32 [#allocation8], 4
      %s30 = int_to_ptr.vmem [resolvable:$true] %s29
      %35 = dma.hbm_to_vmem [thread:$0]  %s28, 256, %s30, [#allocation9], 128, 128, 8
    $region9: #{tpu_custom_call.1} parent=1 // pred_fallthru
      _
    // Predicated region
    $region10: #{tpu_custom_call.1} parent=1 // pred_check
      _
    $region11: #{tpu_custom_call.1} parent=1 // pred_check_branch
      %37 = sbr.rel (0) target = $region13
    $region12: #{tpu_custom_call.1} parent=1 // pred_region
      %39 = dma.done [#allocation6], 256
    $region13: #{tpu_custom_call.1} parent=1 // pred_fallthru
      _
    // Predicated region
    $region14: #{tpu_custom_call.1} parent=1 // pred_check
      _
    $region15: #{tpu_custom_call.1} parent=1 // pred_check_branch
      %41 = sbr.rel (0) target = $region17
    $region16: #{tpu_custom_call.1} parent=1 // pred_region
      %43 = dma.done [#allocation9], 256
    $region17: #{tpu_custom_call.1} parent=1 // pred_fallthru
      _
    %p44 = scmp.eq.s32.totalorder 0, 0
    // Predicated region
    $region18: #{tpu_custom_call.1} parent=1 // pred_check
      %p45 = pneg %p44
    $region19: #{tpu_custom_call.1} parent=1 // pred_check_branch
      %47 = sbr.rel (%p45) target = $region21
    $region20: #{tpu_custom_call.1} parent=1 // pred_region
      %48 = vst [vmem:[#allocation2] sm:$0x1] 0.0
      %49 = vst [vmem:[#allocation2 + $0x1] sm:$0x1] 0.0
      %50 = vst [vmem:[#allocation3] sm:$0x1] -inf
      %51 = vst [vmem:[#allocation3 + $0x1] sm:$0x1] -inf
      %52 = vst [vmem:[#allocation4] sm:$0x1] inf
      %53 = vst [vmem:[#allocation4 + $0x1] sm:$0x1] inf
    $region21: #{tpu_custom_call.1} parent=1 // pred_fallthru
      _
    %v54 = vld [vmem:[#allocation5] sm:$0xff]
    %v55 = vld [vmem:[#allocation5 + $0x8] sm:$0xff]
    %v56 = vld [vmem:[#allocation8] sm:$0xff]
    %v57 = vld [vmem:[#allocation8 + $0x8] sm:$0xff]
    %v58 = vsub.f32 %v54, %v56
    %v59 = vsub.f32 %v55, %v57
    %v60 = vmul.f32 %v58, %v58
    %v61 = vmul.f32 %v59, %v59
    %v62 = vld [vmem:[#allocation2] sm:$0x1]
    %v63 = vld [vmem:[#allocation2 + $0x1] sm:$0x1]
    %v64 = vrot.slane %v60, 4
    %v65 = vadd.f32 %v60, %v64
    %v66 = vrot.slane %v65, 2
    %v67 = vadd.f32 %v65, %v66
    %v68 = vrot.slane %v67, 1
    %v69 = vadd.f32 %v67, %v68
    %v70 = vrot.slane %v61, 4
    %v71 = vadd.f32 %v61, %v70
    %v72 = vrot.slane %v71, 2
    %v73 = vadd.f32 %v71, %v72
    %v74 = vrot.slane %v73, 1
    %v75 = vadd.f32 %v73, %v74
    %v76 = vadd.f32 %v62, %v69
    %v77 = vadd.f32 %v63, %v75
    %78 = vst [vmem:[#allocation2] sm:$0x1] %v76
    %79 = vst [vmem:[#allocation2 + $0x1] sm:$0x1] %v77
    %v80 = vld [vmem:[#allocation3] sm:$0x1]
    %v81 = vld [vmem:[#allocation3 + $0x1] sm:$0x1]
    %v82 = vrot.slane %v56, 4
    %v83 = vmax.f32 %v56, %v82
    %v84 = vrot.slane %v83, 2
    %v85 = vmax.f32 %v83, %v84
    %v86 = vrot.slane %v85, 1
    %v87 = vmax.f32 %v85, %v86
    %v88 = vrot.slane %v57, 4
    %v89 = vmax.f32 %v57, %v88
    %v90 = vrot.slane %v89, 2
    %v91 = vmax.f32 %v89, %v90
    %v92 = vrot.slane %v91, 1
    %v93 = vmax.f32 %v91, %v92
    %v94 = vmax.f32 %v80, %v87
    %v95 = vmax.f32 %v81, %v93
    %96 = vst [vmem:[#allocation3] sm:$0x1] %v94
    %97 = vst [vmem:[#allocation3 + $0x1] sm:$0x1] %v95
    %v98 = vld [vmem:[#allocation4] sm:$0x1]
    %v99 = vld [vmem:[#allocation4 + $0x1] sm:$0x1]
    %v100 = vrot.slane %v56, 4
    %v101 = vmin.f32 %v56, %v100
    %v102 = vrot.slane %v101, 2
    %v103 = vmin.f32 %v101, %v102
    %v104 = vrot.slane %v103, 1
    %v105 = vmin.f32 %v103, %v104
    %v106 = vrot.slane %v57, 4
    %v107 = vmin.f32 %v57, %v106
    %v108 = vrot.slane %v107, 2
    %v109 = vmin.f32 %v107, %v108
    %v110 = vrot.slane %v109, 1
    %v111 = vmin.f32 %v109, %v110
    %v112 = vmin.f32 %v98, %v105
    %v113 = vmin.f32 %v99, %v111
    %114 = vst [vmem:[#allocation4] sm:$0x1] %v112
    %115 = vst [vmem:[#allocation4 + $0x1] sm:$0x1] %v113
    // Predicated region
    $region22: #{tpu_custom_call.1} parent=1 // pred_check
      %p116 = pneg %p44
    $region23: #{tpu_custom_call.1} parent=1 // pred_check_branch
      %118 = sbr.rel (%p116) target = $region25
    $region24: #{tpu_custom_call.1} parent=1 // pred_region
      %v119 = vld [vmem:[#allocation2] sm:$0x1]
      %v120 = vld [vmem:[#allocation2 + $0x1] sm:$0x1]
      %vm121 = vcmask 1040384
      %v122 = vsel %vm121, %v119, 0.0
      %123 = vadd.xlane.f32.xlu0 %v122
      %v124 = vpop.xlane.xlu0 %123
      %v125 = vsel %vm121, %v120, 0.0
      %126 = vadd.xlane.f32.xlu0 %v125
      %v127 = vpop.xlane.xlu0 %126
      %v128 = vmul.f32 %v124, 0.0009765625
      %v129 = vmul.f32 %v127, 0.0009765625
      %v130 = vadd.f32 %v128, 1e-08
      %v131 = vadd.f32 %v129, 1e-08
      %v132 = vld [vmem:[#allocation3] sm:$0x1]
      %v133 = vld [vmem:[#allocation3 + $0x1] sm:$0x1]
      %v134 = vsel %vm121, %v132, -inf
      %135 = vmax.xlane.f32.xlu0 %v134
      %v136 = vpop.xlane.xlu0 %135
      %v137 = vsel %vm121, %v133, -inf
      %138 = vmax.xlane.f32.xlu0 %v137
      %v139 = vpop.xlane.xlu0 %138
      %v140 = vld [vmem:[#allocation4] sm:$0x1]
      %v141 = vld [vmem:[#allocation4 + $0x1] sm:$0x1]
      %v142 = vsel %vm121, %v140, inf
      %143 = vmin.xlane.f32.xlu0 %v142
      %v144 = vpop.xlane.xlu0 %143
      %v145 = vsel %vm121, %v141, inf
      %146 = vmin.xlane.f32.xlu0 %v145
      %v147 = vpop.xlane.xlu0 %146
      %v148 = vsub.f32 %v136, %v144
      %v149 = vsub.f32 %v139, %v147
      %v150 = vadd.f32 %v148, 1e-08
      %v151 = vadd.f32 %v149, 1e-08
      %v152 = vmul.f32 %v150, %v150
      %v153 = vmul.f32 %v151, %v151
      %v154 = vrcp.pop %v130
      %v155 = vmul.f32 %v130, %v154
      %v156 = vsub.f32 1.0, %v155
      %v157 = vmul.f32 %v154, %v156
      %v158 = vadd.f32 %v154, %v157
      %vm159 = vweird.f32 %v130
      %vm160 = vweird.f32 %v154
      %vm161 = vmor %vm159, %vm160
      %v162 = vsel %vm161, %v154, %v158
      %v163 = vand.u32 2147483647, %v130
      %vm164 = vcmp.eq.f32.partialorder %v163, 8.507059e+37
      %v165 = vand.u32 %v130, 2147483648
      %v166 = vor.u32 1.1754944e-38, %v165
      %v167 = vsel %vm164, %v166, %v162
      %v168 = vmul.f32 %v152, %v167
      %v169 = vrcp.pop %v131
      %v170 = vmul.f32 %v131, %v169
      %v171 = vsub.f32 1.0, %v170
      %v172 = vmul.f32 %v169, %v171
      %v173 = vadd.f32 %v169, %v172
      %vm174 = vweird.f32 %v131
      %vm175 = vweird.f32 %v169
      %vm176 = vmor %vm174, %vm175
      %v177 = vsel %vm176, %v169, %v173
      %v178 = vand.u32 2147483647, %v131
      %vm179 = vcmp.eq.f32.partialorder %v178, 8.507059e+37
      %v180 = vand.u32 %v131, 2147483648
      %v181 = vor.u32 1.1754944e-38, %v180
      %v182 = vsel %vm179, %v181, %v177
      %v183 = vmul.f32 %v153, %v182
      %v184 = vlog2.pop %v168
      %v185 = vmul.f32 %v184, 0.6931472
      %v186 = vlog2.pop %v183
      %v187 = vmul.f32 %v186, 0.6931472
      %v188 = vmul.f32 %v185, 4.3429446
      %v189 = vmul.f32 %v187, 4.3429446
      %v190 = vsub.f32 50.0, %v188
      %v191 = vsub.f32 50.0, %v189
      %192 = vst [vmem:[#allocation10] sm:$0x1] %v190
      %193 = vst [vmem:[#allocation10 + $0x1] sm:$0x1] %v191
    $region25: #{tpu_custom_call.1} parent=1 // pred_fallthru
      _
    // Predicated region
    $region26: #{tpu_custom_call.1} parent=1 // pred_check
      _
    $region27: #{tpu_custom_call.1} parent=1 // pred_check_branch
      %195 = sbr.rel (0) target = $region29
    $region28: #{tpu_custom_call.1} parent=1 // pred_region
      %197 = vsyncadd [#allocation7], 0
      %s198 = sshll.u32 [#allocation10], 4
      %s199 = int_to_ptr.vmem [resolvable:$true] %s198
      %s200 = sshll.u32 %s2, 4
      %s201 = int_to_ptr.hbm [resolvable:$true] %s200
      %206 = dma.vmem_to_hbm [thread:$0]  %s199, 32, %s201, [#allocation7], 16, 16, 1
    $region29: #{tpu_custom_call.1} parent=1 // pred_fallthru
      _
    // Predicated region
    $region30: #{tpu_custom_call.1} parent=1 // pred_check
      _
    $region31: #{tpu_custom_call.1} parent=1 // pred_check_branch
      %208 = sbr.rel (0) target = $region33
    $region32: #{tpu_custom_call.1} parent=1 // pred_region
      %210 = dma.done [#allocation7], 32
    $region33: #{tpu_custom_call.1} parent=1 // pred_fallthru
      _
    %211 = vsyncpa [#allocation6], 1
    %212 = vsyncpa [#allocation9], 1
    %213 = vsyncpa [#allocation7], 1

</llo_original>
